<compile_context>
chip_gen: v5e
topology: v5e:2x2
jax: 0.10.0
libtpu: 0.0.40
codegen_flags: <defaults>
</compile_context>

<pallas_src>
import functools

import jax
import jax.numpy as jnp
from jax.experimental import pallas as pl
from jax.experimental.pallas import tpu as pltpu


# ----------------------------------------------------------------------------
# helpers (used inside kernels)
# ----------------------------------------------------------------------------
def _round_up(x, m):
    return ((x + m - 1) // m) * m


def _layernorm(x, g, b, eps):
    mu = jnp.mean(x, axis=-1, keepdims=True)
    var = jnp.mean((x - mu) ** 2, axis=-1, keepdims=True)
    return (x - mu) * jax.lax.rsqrt(var + eps) * g + b


def _gelu_tanh(x):
    # TODO(synk): PyTorch nn.GELU() default uses exact erf; the tanh
    # approximation is used because tanh runs on the EUP (separate bundle
    # slot).  Max abs deviation ~1e-3, below the bf16 matmul noise floor.
    c = 0.7978845608028654  # sqrt(2/pi)
    return 0.5 * x * (1.0 + jnp.tanh(c * (x + 0.044715 * x * x * x)))


# ----------------------------------------------------------------------------
# patch-embed / generic tiled linear kernel
# ----------------------------------------------------------------------------
def _linear_kernel(x_ref, w_ref, b_ref, o_ref):
    o_ref[...] = (jnp.dot(x_ref[...], w_ref[...],
                          preferred_element_type=jnp.float32) + b_ref[...])


def linear_pallas(x, w, b, *, tm=512):
    """x:(M,K) @ w:(K,N) + b:(N,) -> (M,N) f32.  Tiled over M, bf16 MXU inputs."""
    M, K = x.shape
    N = w.shape[1]
    tm = min(tm, _round_up(M, 8))
    Mp = _round_up(M, tm)
    xb = x.astype(jnp.bfloat16)
    if Mp != M:
        xb = jnp.pad(xb, ((0, Mp - M), (0, 0)))
    out = pl.pallas_call(
        _linear_kernel,
        out_shape=jax.ShapeDtypeStruct((Mp, N), jnp.float32),
        grid=(Mp // tm,),
        in_specs=[
            pl.BlockSpec((tm, K), lambda i: (i, 0)),
            pl.BlockSpec((K, N), lambda i: (0, 0)),
            pl.BlockSpec((1, N), lambda i: (0, 0)),
        ],
        out_specs=pl.BlockSpec((tm, N), lambda i: (i, 0)),
        compiler_params=pltpu.CompilerParams(
            dimension_semantics=("parallel",)),
    )(xb, w.astype(jnp.bfloat16), b.reshape(1, N).astype(jnp.float32))
    return out[:M]


# ----------------------------------------------------------------------------
# generation-aware VMEM planning for the fused transformer stack
# ----------------------------------------------------------------------------
def _vmem_capacity_bytes():
    try:
        info = pltpu.get_tpu_info()
        cap = getattr(info, "vmem_capacity_bytes", None)
        if cap:
            return int(cap)
    except Exception:
        pass
    return 128 * 1024 * 1024          # v5e/v6e default if the query is unavailable


def _stack_vmem_plan(B, Sp, D, hid, n_heads):
    """Pick (tb, vmem_limit_bytes) from the chip's actual VMEM capacity.

    v7x (64 MiB/TC) ends up with a small tb; v5e/v6e (128 MiB) take a large tb
    so that per-chunk compute hides the per-layer weight DMA.
    """
    cap = _vmem_capacity_bytes()
    vmem_limit = int(cap * 0.8)                       # headroom for the compiler
    # per-layer streamed weights (bf16 matrices + small f32 packs), x2 buffers
    wbytes = 2 * (2 * (4 * D * D + 2 * D * hid)
                  + 4 * (6 * D + 3 * D * 128 + 8 * max(hid, 128)))
    # per batch row: input block + resident carry block, each double-buffered
    act_per_row = 4 * (Sp * D * 4)
    # in-kernel temporaries for one batch row (qkvT, scores, probs, MLP hidden)
    tmp = 4 * (3 * D * Sp + 2 * n_heads * Sp * Sp + 2 * Sp * hid + 6 * Sp * D)
    tb = max(1, min(B, 16))
    while tb > 1 and wbytes + tb * act_per_row + tmp > vmem_limit:
        tb -= 1
    return tb, vmem_limit


# ----------------------------------------------------------------------------
# fused transformer stack: grid = (batch_chunks, depth)
# ----------------------------------------------------------------------------
def _stack_kernel(x_ref,
                  wqkv_ref, wp_ref, w1_ref, w2_ref,
                  vec_ref, bqkv_ref, b1_ref,
                  o_ref, *, n_heads, s_real):
    """One transformer layer applied to a (TB, Sp, D) activation block.

    The activation carry lives in the output block (resident in VMEM across
    the inner 'arbitrary' depth axis); per-layer weights stream along it.
    """
    # initialize the carry from the input tokens at the first layer.
    @pl.when(pl.program_id(1) == 0)
    def _():
        o_ref[...] = x_ref[...]

    TB, Sp, D = o_ref.shape
    hd = D // n_heads
    bf16 = jnp.bfloat16

    wqkv = wqkv_ref[0]            # (3D, D)  bf16  (rows: q|k|v, head-major)
    wp = wp_ref[0]                # (D, D)   bf16  (rows: d_in = h*hd+e)
    w1 = w1_ref[0]                # (D, hid) bf16
    w2 = w2_ref[0]                # (hid, D) bf16
    bqkv = bqkv_ref[0]            # (3D, 1)  f32   (q rows pre-scaled)
    b1 = b1_ref[0]                # (1, hid) f32
    vecs = vec_ref[0]             # (6, D)   f32
    g1, be1 = vecs[0:1], vecs[1:2]
    g2, be2 = vecs[2:3], vecs[3:4]
    bp, b2 = vecs[4:5], vecs[5:6]

    kmask = None
    if s_real != Sp:              # mask padded key positions
        kidx = jax.lax.broadcasted_iota(jnp.int32, (Sp, Sp), 1)
        kmask = kidx < s_real

    # The short per-batch-row loop keeps every reshape sublane-tile aligned
    # (hd is a multiple of 8) while matmul width/contraction depth stay full;
    # the streamed weights are still amortized over the whole TB chunk.
    for b in range(TB):
        xb = o_ref[b]                                             # (Sp, D) f32

        # ---------------- attention branch ----------------
        yb = _layernorm(xb, g1, be1, 1e-5).astype(bf16)           # norm_1

        # fused QKV projection, transposed output: one full-depth matmul.
        qkvT = jnp.einsum('fd,sd->fs', wqkv, yb,
                          preferred_element_type=jnp.float32) + bqkv   # (3D, Sp)
        qkvT = qkvT.reshape(3 * n_heads, hd, Sp)    # sublane-tile-aligned split
        qT = qkvT[:n_heads].astype(bf16)            # (nh, hd, Sp), scale folded
        kT = qkvT[n_heads:2 * n_heads].astype(bf16)
        vT = qkvT[2 * n_heads:].astype(bf16)

        s = jnp.einsum('hei,hej->hij', qT, kT,
                       preferred_element_type=jnp.float32)        # (nh, Sp, Sp)
        if kmask is not None:
            s = jnp.where(kmask[None], s, -1e30)
        m = jnp.max(s, axis=-1, keepdims=True)
        e = jnp.exp(s - m)
        p = e * pl.reciprocal(jnp.sum(e, axis=-1, keepdims=True), approx=True)

        oT = jnp.einsum('hej,hij->hei', vT, p.astype(bf16),
                        preferred_element_type=jnp.float32)       # (nh, hd, Sp)
        attnT = oT.reshape(D, Sp).astype(bf16)      # heads merged on sublanes

        # head-merged output projection: single full-depth (D, D) matmul
        proj = jnp.einsum('ds,de->se', attnT, wp,
                          preferred_element_type=jnp.float32) + bp  # (Sp, D)
        x1 = xb + proj                                            # residual 1

        # ---------------- MLP branch ----------------
        y2 = _layernorm(x1, g2, be2, 1e-5).astype(bf16)           # norm_2
        h = jnp.dot(y2, w1, preferred_element_type=jnp.float32) + b1
        h = _gelu_tanh(h).astype(bf16)
        h2 = jnp.dot(h, w2, preferred_element_type=jnp.float32) + b2

        o_ref[b] = x1 + h2                                        # residual 2


def transformer_stack_pallas(seq, stacked, *, n_heads, s_real):
    """Run all `depth` transformer blocks in one pallas_call.

    seq: (B, Sp, D) f32 with Sp a multiple of 8.  Stacked weights carry a
    leading depth axis and are streamed layer-by-layer while the activations
    stay resident in VMEM.  The input is aliased to the output carry.
    """
    B, Sp, D = seq.shape
    L = stacked["wqkv"].shape[0]
    hid = stacked["w1"].shape[2]

    tb, vmem_limit = _stack_vmem_plan(B, Sp, D, hid, n_heads)
    Bp = _round_up(B, tb)
    if Bp != B:
        seq = jnp.pad(seq, ((0, Bp - B), (0, 0), (0, 0)))

    def _l_spec(shape):
        nd = len(shape)
        return pl.BlockSpec((1,) + tuple(shape),
                            lambda b, l, _nd=nd: (l,) + (0,) * _nd)

    in_specs = [
        pl.BlockSpec((tb, Sp, D), lambda b, l: (b, 0, 0)),
        _l_spec((3 * D, D)),       # wqkv
        _l_spec((D, D)),           # wp
        _l_spec((D, hid)),         # w1
        _l_spec((hid, D)),         # w2
        _l_spec((6, D)),           # packed ln1_g/ln1_b/ln2_g/ln2_b/bp/b2
        _l_spec((3 * D, 1)),       # bqkv (transposed)
        _l_spec((1, hid)),         # b1
    ]

    out = pl.pallas_call(
        functools.partial(_stack_kernel, n_heads=n_heads, s_real=s_real),
        out_shape=jax.ShapeDtypeStruct((Bp, Sp, D), jnp.float32),
        grid=(Bp // tb, L),
        in_specs=in_specs,
        out_specs=pl.BlockSpec((tb, Sp, D), lambda b, l: (b, 0, 0)),
        input_output_aliases={0: 0},
        compiler_params=pltpu.CompilerParams(
            # depth axis carries the activation -> 'arbitrary'; batch chunks
            # are independent -> 'parallel'.
            # TODO(synk): on v7x mark the batch axis CORE_PARALLEL (and keep
            #             >=2 chunks) to shard across the 2 TensorCores.
            dimension_semantics=("parallel", "arbitrary"),
            vmem_limit_bytes=vmem_limit,
        ),
    )(seq, stacked["wqkv"], stacked["wp"], stacked["w1"], stacked["w2"],
      stacked["vecs"], stacked["bqkv"], stacked["b1"])
    return out[:B]


# ----------------------------------------------------------------------------
# final LayerNorm(eps=1e-6) + classification head
# ----------------------------------------------------------------------------
def _head_kernel(x_ref, g_ref, b_ref, w_ref, bias_ref, o_ref):
    y = _layernorm(x_ref[...], g_ref[...], b_ref[...], 1e-6)
    o_ref[...] = (jnp.dot(y.astype(jnp.bfloat16), w_ref[...],
                          preferred_element_type=jnp.float32) + bias_ref[...])


def head_pallas(x, g, b, w, bias):
    """x:(B,D); w:(n_cls,D) torch layout -> logits (B, n_cls)."""
    B, D = x.shape
    n_cls = w.shape[0]
    return pl.pallas_call(
        _head_kernel,
        out_shape=jax.ShapeDtypeStruct((B, n_cls), jnp.float32),
    )(x, g.reshape(1, D), b.reshape(1, D),
      w.T.astype(jnp.bfloat16), bias.reshape(1, n_cls))


# ----------------------------------------------------------------------------
# parameters
# ----------------------------------------------------------------------------
def init_vit_params(key, *, im_size, patch_size, in_chs, emb_dim, n_heads,
                    mlp_ratio, depth, n_cls):
    del n_heads
    n_patches = (im_size // patch_size) ** 2
    hid = int(emb_dim * mlp_ratio)

    def nrm(k, shape, scale=0.02):
        return (scale * jax.random.normal(k, shape)).astype(jnp.float32)

    keys = iter(jax.random.split(key, 8 + depth * 8))
    params = {
        "pe_w": nrm(next(keys), (emb_dim, in_chs, patch_size, patch_size)),
        "pe_b": nrm(next(keys), (emb_dim,)),
        "cls": nrm(next(keys), (1, 1, emb_dim)),
        "pos": nrm(next(keys), (1, n_patches + 1, emb_dim)),
        "ln_g": jnp.ones((emb_dim,), jnp.float32),
        "ln_b": jnp.zeros((emb_dim,), jnp.float32),
        "head_w": nrm(next(keys), (n_cls, emb_dim)),
        "head_b": nrm(next(keys), (n_cls,)),
        "blocks": [],
    }
    for _ in range(depth):
        params["blocks"].append({
            "ln1_g": jnp.ones((emb_dim,), jnp.float32),
            "ln1_b": jnp.zeros((emb_dim,), jnp.float32),
            "qkv_w": nrm(next(keys), (3 * emb_dim, emb_dim)),   # torch (out, in)
            "qkv_b": nrm(next(keys), (3 * emb_dim,)),
            "proj_w": nrm(next(keys), (emb_dim, emb_dim)),
            "proj_b": nrm(next(keys), (emb_dim,)),
            "ln2_g": jnp.ones((emb_dim,), jnp.float32),
            "ln2_b": jnp.zeros((emb_dim,), jnp.float32),
            "fc1_w": nrm(next(keys), (hid, emb_dim)),
            "fc1_b": nrm(next(keys), (hid,)),
            "fc2_w": nrm(next(keys), (emb_dim, hid)),
            "fc2_b": nrm(next(keys), (emb_dim,)),
        })
    return params


def stack_block_params(blocks, *, n_heads):
    """Stack per-layer weights along a leading depth axis in kernel layout."""
    D = blocks[0]["ln1_g"].shape[0]
    hid = blocks[0]["fc1_w"].shape[0]
    hd = D // n_heads
    # TODO(synk): head_dim not a multiple of 8 would need a padded head layout.
    assert hd % 8 == 0, "head_dim must be a multiple of 8 for the fused kernel"
    scale = float(hd) ** -0.5
    bf16 = jnp.bfloat16

    def st(fn):
        return jnp.stack([fn(blk) for blk in blocks], axis=0)

    def wqkv(blk):   # torch (3D, D), rows [q|k|v] head-major; fold scale into q
        w = blk["qkv_w"]
        return jnp.concatenate([w[:D] * scale, w[D:]], axis=0).astype(bf16)

    def bqkv(blk):   # transposed bias (3D, 1), q part pre-scaled
        b = blk["qkv_b"]
        b = jnp.concatenate([b[:D] * scale, b[D:]], axis=0)
        return b.reshape(3 * D, 1).astype(jnp.float32)

    return {
        "wqkv": st(wqkv),                                        # (L, 3D, D) bf16
        "bqkv": st(bqkv),                                        # (L, 3D, 1) f32
        "wp": st(lambda blk: blk["proj_w"].T.astype(bf16)),      # (L, D, D)
        "w1": st(lambda blk: blk["fc1_w"].T.astype(bf16)),       # (L, D, hid)
        "w2": st(lambda blk: blk["fc2_w"].T.astype(bf16)),       # (L, hid, D)
        "b1": st(lambda blk: blk["fc1_b"].reshape(1, hid).astype(jnp.float32)),
        "vecs": st(lambda blk: jnp.stack(
            [blk["ln1_g"], blk["ln1_b"], blk["ln2_g"], blk["ln2_b"],
             blk["proj_b"], blk["fc2_b"]], axis=0).astype(jnp.float32)),  # (L,6,D)
    }


# ----------------------------------------------------------------------------
# forward
# ----------------------------------------------------------------------------
def vit_forward(x, params, *, patch_size, n_heads):
    B, C, H, W = x.shape
    p = patch_size
    emb_dim = params["pe_w"].shape[0]
    n_patches = (H // p) * (W // p)

    # PatchEmbed: Conv2d(kernel=stride=p) == patchify (glue) + tiled matmul.
    xp = x.reshape(B, C, H // p, p, W // p, p)
    xp = xp.transpose(0, 2, 4, 1, 3, 5).reshape(B * n_patches, C * p * p)
    w_pe = params["pe_w"].reshape(emb_dim, C * p * p).T          # (C*p*p, emb)
    tokens = linear_pallas(xp, w_pe, params["pe_b"])
    tokens = tokens.reshape(B, n_patches, emb_dim)

    # cls token + positional embedding (pos_drop: identity, p = 0)
    cls = jnp.broadcast_to(params["cls"], (B, 1, emb_dim))
    seq = jnp.concatenate([cls, tokens], axis=1) + params["pos"]  # (B, S, D)

    # pad sequence length to a sublane multiple; padded keys masked in-kernel.
    S = n_patches + 1
    Sp = _round_up(S, 8)
    if Sp != S:
        seq = jnp.pad(seq, ((0, 0), (0, Sp - S), (0, 0)))

    stacked = stack_block_params(params["blocks"], n_heads=n_heads)
    seq = transformer_stack_pallas(seq, stacked, n_heads=n_heads, s_real=S)

    # final LayerNorm is row-wise -> taking the cls row first is equivalent.
    cls_out = seq[:, 0, :]
    return head_pallas(cls_out, params["ln_g"], params["ln_b"],
                       params["head_w"], params["head_b"])


# ----------------------------------------------------------------------------
if __name__ == "__main__":
    # small but structurally faithful config
    IM_SIZE, PATCH, IN_CHS = 16, 4, 3
    EMB_DIM, N_HEADS, MLP_RATIO = 32, 4, 4.0
    DEPTH, N_CLS, BATCH = 2, 10, 2

    key = jax.random.PRNGKey(0)
    k_x, k_p = jax.random.split(key)
    x = jax.random.uniform(k_x, (BATCH, IN_CHS, IM_SIZE, IM_SIZE),
                           dtype=jnp.float32)        # like torch.rand (NCHW)

    params = init_vit_params(
        k_p, im_size=IM_SIZE, patch_size=PATCH, in_chs=IN_CHS,
        emb_dim=EMB_DIM, n_heads=N_HEADS, mlp_ratio=MLP_RATIO,
        depth=DEPTH, n_cls=N_CLS)

    out = vit_forward(x, params, patch_size=PATCH, n_heads=N_HEADS)
    out = jax.block_until_ready(out)

    assert out.shape == (BATCH, N_CLS), out.shape
    assert bool(jnp.all(jnp.isfinite(out)))
    print("KERNEL_OK")
</pallas_src>

<mosaic_0001>
module attributes {stable_mosaic.version = 11 : i64} {
  func.func @_linear_kernel(%arg0: i32, %arg1: memref<32x48xbf16, #tpu.memory_space<vmem>>, %arg2: memref<48x32xbf16, #tpu.memory_space<vmem>>, %arg3: memref<1x32xf32, #tpu.memory_space<vmem>>, %arg4: memref<32x32xf32, #tpu.memory_space<vmem>>) attributes {dimension_semantics = [#tpu.dimension_semantics<parallel>], iteration_bounds = array<i64: 1>, scalar_prefetch = 0 : i64, scratch_operands = 0 : i64, tpu.core_type = #tpu.core_type<tc>, window_params = [{transform_indices = @transform_0, window_bounds = array<i64: 32, 48>}, {pipeline_mode = #tpu.pipeline_mode<synchronous>, transform_indices = @transform_1, window_bounds = array<i64: 48, 32>}, {pipeline_mode = #tpu.pipeline_mode<synchronous>, transform_indices = @transform_2, window_bounds = array<i64: 1, 32>}, {transform_indices = @transform_3, window_bounds = array<i64: 32, 32>}]} {
    %c0 = arith.constant 0 : index
    %c0_0 = arith.constant 0 : index
    %0 = vector.load %arg1[%c0, %c0_0] : memref<32x48xbf16, #tpu.memory_space<vmem>>, vector<32x48xbf16>
    %c0_1 = arith.constant 0 : index
    %c0_2 = arith.constant 0 : index
    %1 = vector.load %arg2[%c0_1, %c0_2] : memref<48x32xbf16, #tpu.memory_space<vmem>>, vector<48x32xbf16>
    %cst = arith.constant dense<0.000000e+00> : vector<32x32xf32>
    %2 = tpu.matmul %0, %1, %cst {dimension_numbers = #tpu.dot_dimension_numbers<[1], [0], [0], [1], [0, 0, 1, 1], [], []>} : vector<32x48xbf16>, vector<48x32xbf16>, vector<32x32xf32> -> vector<32x32xf32>
    %c0_3 = arith.constant 0 : index
    %c0_4 = arith.constant 0 : index
    %3 = vector.load %arg3[%c0_3, %c0_4] : memref<1x32xf32, #tpu.memory_space<vmem>>, vector<1x32xf32>
    %4 = vector.broadcast %3 : vector<1x32xf32> to vector<32x32xf32>
    %5 = arith.addf %2, %4 : vector<32x32xf32>
    %c0_5 = arith.constant 0 : index
    %c0_6 = arith.constant 0 : index
    %6 = vector.load %arg4[%c0_5, %c0_6] : memref<32x32xf32, #tpu.memory_space<vmem>>, vector<32x32xf32>
    tpu.vector_store %arg4[%c0_5, %c0_6], %5 {strides = array<i32>} : memref<32x32xf32, #tpu.memory_space<vmem>>, vector<32x32xf32>,
    return
  }
  func.func @transform_0(%arg0: i32) -> (i32, i32) {
    %c0_i32 = arith.constant 0 : i32
    %c0_i32_0 = arith.constant 0 : i32
    return %arg0, %c0_i32 : i32, i32
  }
  func.func @transform_1(%arg0: i32) -> (i32, i32) {
    %c0_i32 = arith.constant 0 : i32
    %c0_i32_0 = arith.constant 0 : i32
    %c0_i32_1 = arith.constant 0 : i32
    return %c0_i32, %c0_i32_0 : i32, i32
  }
  func.func @transform_2(%arg0: i32) -> (i32, i32) {
    %c0_i32 = arith.constant 0 : i32
    %c0_i32_0 = arith.constant 0 : i32
    %c0_i32_1 = arith.constant 0 : i32
    return %c0_i32, %c0_i32_0 : i32, i32
  }
  func.func @transform_3(%arg0: i32) -> (i32, i32) {
    %c0_i32 = arith.constant 0 : i32
    %c0_i32_0 = arith.constant 0 : i32
    return %arg0, %c0_i32 : i32, i32
  }
}

</mosaic_0001>

<llo_original>
// kernel: tpu_custom_call.1
$region0: #{tpu_custom_call.1}
  #allocation0 [shape = 'u32[]', space=smem, size = 0x4, offset = 0x4, fixed_abs, tag = 'smem constant byte address 0x4 - core index']
  #allocation1 [shape = 'u32[72,128]{1,0:T(1,128)}', space=vmem, size = 0x9000, scoped, tag = 'internal scratch']
  %s0 = inlined_call_operand.vmem [shape: bf16[32,48], index: 0, kind: input, shape index: {}]
  %s1 = inlined_call_operand.vmem [shape: bf16[48,32], index: 1, kind: input, shape index: {}]
  %s2 = inlined_call_operand.vmem [shape: f32[1,32], index: 2, kind: input, shape index: {}]
  %s3 = inlined_call_operand.hbm [shape: f32[32,32], index: 3, kind: output, shape index: {}]
  %s4 = sld [smem:[#allocation0]]
  $region22: #{tpu_custom_call.1} parent=0
    _
  %s6 = ssub.s32 1, %s4
  %s7 = scalar_select 0, %s6, %s4
  $region1: #{tpu_custom_call.1} parent=0
    #allocation2 [shape = 'u8[16384]{0}', space=vmem, size = 0x4000, scoped, tag = 'output window, operand 0, single buffered']
    #allocation3 [shape = 's32[1]{0}', space=sflag, size = 0x4, scoped, tag = 'scoped memory for tpu_custom_call.1']
    %8 = vsyncpa [#allocation3], 0
    // Predicated region
    $region2: #{tpu_custom_call.1} parent=1 // pred_check
      _
    $region3: #{tpu_custom_call.1} parent=1 // pred_check_branch
      %10 = sbr.rel (0) target = $region5
    $region4: #{tpu_custom_call.1} parent=1 // pred_region
      _
    $region5: #{tpu_custom_call.1} parent=1 // pred_fallthru
      _
    // Predicated region
    $region6: #{tpu_custom_call.1} parent=1 // pred_check
      _
    $region7: #{tpu_custom_call.1} parent=1 // pred_check_branch
      %12 = sbr.rel (0) target = $region9
    $region8: #{tpu_custom_call.1} parent=1 // pred_region
      _
    $region9: #{tpu_custom_call.1} parent=1 // pred_fallthru
      _
    // Predicated region
    $region10: #{tpu_custom_call.1} parent=1 // pred_check
      _
    $region11: #{tpu_custom_call.1} parent=1 // pred_check_branch
      %14 = sbr.rel (0) target = $region13
    $region12: #{tpu_custom_call.1} parent=1 // pred_region
      _
    $region13: #{tpu_custom_call.1} parent=1 // pred_fallthru
      _
    %v16 = vld [vmem:[%s0] sm:$0xf]
    %v17 = vld [vmem:[%s0 + $0x4] sm:$0xf]
    %v18 = vld [vmem:[%s0 + $0x8] sm:$0xf]
    %v19 = vld [vmem:[%s0 + $0xc] sm:$0xf]
    %v20 = vld [vmem:[%s1] sm:$0xf]
    %v21 = vld [vmem:[%s1 + $0x4] sm:$0xf]
    %v22 = vld [vmem:[%s1 + $0x8] sm:$0xf]
    %v23 = vld [vmem:[%s1 + $0xc] sm:$0xf]
    %v24 = vld [vmem:[%s1 + $0x10] sm:$0xf]
    %v25 = vld [vmem:[%s1 + $0x14] sm:$0xf]
    %v26 = vld [vmem:[%s2] sm:$0x1]
    %v28 = vperm.slane %v26, 0
    %v34 = vunpack.c.l.b16 %v16
    %v35 = vunpack.c.l.b16 %v17
    %v36 = vunpack.c.l.b16 %v18
    %v37 = vunpack.c.l.b16 %v19
    %v38 = vpack.c.b16 %v35, %v34
    %v39 = vpack.c.b16 %v37, %v36
    %v46 = vunpack.c.l.b16 %v20
    %v47 = vunpack.c.l.b16 %v21
    %v48 = vunpack.c.l.b16 %v22
    %v49 = vunpack.c.l.b16 %v23
    %v50 = vunpack.c.l.b16 %v24
    %v51 = vunpack.c.l.b16 %v25
    %v52 = vpack.c.b16 %v47, %v46
    %v53 = vpack.c.b16 %v49, %v48
    %v54 = vpack.c.b16 %v51, %v50
    %vm58 = vcmask 392192
    %v60 = vsel %vm58, %v38, 0
    %v63 = vsel %vm58, %v39, 0
    %65 = vmatpush.bf16.msra.mxu0 0
    %66 = vmatpush.bf16.msra.mxu0 0
    %67 = vmatpush.bf16.msra.mxu0 0
    %68 = vmatpush.bf16.msra.mxu0 0
    %69 = vmatpush.bf16.msra.mxu0 0
    %70 = vmatpush.bf16.msra.mxu0 %v54
    %71 = vmatpush.bf16.msra.mxu0 %v53
    %72 = vmatpush.bf16.msra.mxu0 %v52
    %73 = vmatmul.bf16.gmra.mxu0 %v60
    %v74 = vpop.f32.mrf.mxu0
    %v75 = vadd.f32 %v28, %v74
    %v76 = vpop.f32.mrf.mxu0
    %v77 = vadd.f32 %v28, %v76
    %78 = vmatmul.bf16.gmra.mxu0 %v63
    %v79 = vpop.f32.mrf.mxu0
    %v80 = vadd.f32 %v28, %v79
    %v81 = vpop.f32.mrf.mxu0
    %v82 = vadd.f32 %v28, %v81
    %83 = vdwg.mxu0
    %vm84 = vcmask 261120
    %85 = vst.msk [vmem:[#allocation2] sm:$0xff] %vm84, %v75
    %86 = vst.msk [vmem:[#allocation2 + $0x8] sm:$0xff] %vm84, %v77
    %87 = vst.msk [vmem:[#allocation2 + $0x10] sm:$0xff] %vm84, %v80
    %88 = vst.msk [vmem:[#allocation2 + $0x18] sm:$0xff] %vm84, %v82
    // Predicated region
    $region14: #{tpu_custom_call.1} parent=1 // pred_check
      _
    $region15: #{tpu_custom_call.1} parent=1 // pred_check_branch
      %90 = sbr.rel (0) target = $region17
    $region16: #{tpu_custom_call.1} parent=1 // pred_region
      %92 = vsyncadd [#allocation3], 0
      %s93 = sshll.u32 [#allocation2], 4
      %s94 = int_to_ptr.vmem [resolvable:$true] %s93
      %s95 = sshll.u32 %s3, 4
      %s96 = int_to_ptr.hbm [resolvable:$true] %s95
      %101 = dma.vmem_to_hbm [thread:$0]  %s94, 512, %s96, [#allocation3], 128, 128, 8
    $region17: #{tpu_custom_call.1} parent=1 // pred_fallthru
      _
    // Predicated region
    $region18: #{tpu_custom_call.1} parent=1 // pred_check
      _
    $region19: #{tpu_custom_call.1} parent=1 // pred_check_branch
      %103 = sbr.rel (0) target = $region21
    $region20: #{tpu_custom_call.1} parent=1 // pred_region
      %105 = dma.done [#allocation3], 512
    $region21: #{tpu_custom_call.1} parent=1 // pred_fallthru
      _
    %106 = vsyncpa [#allocation3], 1

</llo_original>
